<compile_context>
chip_gen: v7x
topology: tpu7x:2x2x1
jax: 0.10.0
libtpu: 0.0.40
codegen_flags: <defaults>
</compile_context>

<pallas_src>
import math

import jax
import jax.numpy as jnp
from jax.experimental import pallas as pl
from jax.experimental.pallas import tpu as pltpu


def _leaky_relu(x, negative_slope=0.01):
    # matches torch.nn.functional.leaky_relu default (negative_slope=0.01)
    return jnp.where(x >= 0, x, negative_slope * x)


def graph_readout_kernel(x_ref, const_ref, w_ref, wr_ref, br_ref,
                         result_ref, gb_ref):
    x = x_ref[...]                                   # (GB*N, C) edge rows (f32)
    C = x.shape[1]
    GB = result_ref.shape[0]                         # graphs in this block
    N = x.shape[0] // GB                             # edges per graph

    # One wide MXU dot produces both FiLM gates:
    # (GB*N, C) @ (C, 2C) + const(1, 2C) -> (GB*N, 2C)
    pre = jnp.dot(x, w_ref[...], preferred_element_type=jnp.float32) + const_ref[...]
    gb = _leaky_relu(pre)                            # (GB*N, 2C) = [gama | beta]

    # Single fused, lane-dense store (no masked per-half vst.msk stores).
    gb_ref[...] = gb.astype(gb_ref.dtype)

    # FiLM gating + per-graph mean pooling + readout, all inside the block.
    gama = gb[:, :C]
    beta = gb[:, C:]
    new_edge = (gama + 1.0) * x + beta               # (GB*N, C)
    mean = jnp.sum(new_edge.reshape(GB, N, C), axis=1) * (1.0 / N)   # (GB, C)

    res = jnp.dot(mean, wr_ref[...],
                  preferred_element_type=jnp.float32) + br_ref[...]  # (GB, Cout)
    result_ref[...] = _leaky_relu(res).astype(result_ref.dtype)


def _block_vmem_bytes(TM, GB, C, Cout):
    """Rough VMEM budget for one grid step (double-buffered I/O + temps)."""
    f32 = 4
    io = 2 * (TM * C * f32)                # x block (double-buffered)
    io += 2 * (TM * 2 * C * f32)           # fused gb output (double-buffered)
    io += 2 * (GB * Cout * f32)            # result block
    weights = 2 * ((C * 2 * C) + 2 * C + (C * Cout) + Cout) * f32
    temps = 3 * (TM * 2 * C * f32)         # pre / gb / new_edge intermediates
    return io + weights + temps


def _default_graphs_per_block(B, N, C, Cout, *, target_rows=4096, min_grid=2,
                              vmem_cap=48 << 20):
    """Pick GB: 8-aligned divisor of B, big row tiles, >=2 grid steps if possible,
    and a VMEM footprint under `vmem_cap` (safe for v7x's 64 MiB VMEM)."""
    cands = [gb for gb in range(8, B + 1, 8) if B % gb == 0]

    def fits(gb):
        return (gb * N <= target_rows
                and _block_vmem_bytes(gb * N, gb, C, Cout) <= vmem_cap)

    # Prefer the largest tile that still leaves >=min_grid steps (v7x megacore).
    for gb in sorted(cands, reverse=True):
        if fits(gb) and B // gb >= min_grid:
            return gb
    # Otherwise the largest tile that fits at all.
    for gb in sorted(cands, reverse=True):
        if fits(gb):
            return gb
    # Fallback: one full-batch block (no 8-alignment requirement when GB == B).
    return B


def graph_readout(edge_attr, pattern_embedding, params, *,
                  graphs_per_block=None, side_dtype=jnp.float32):
    B, N, C = edge_attr.shape
    Cout = params["W_readout_g"].shape[1]

    GB = (graphs_per_block if graphs_per_block is not None
          else _default_graphs_per_block(B, N, C, Cout))
    assert B % GB == 0, "graphs_per_block must divide the batch"
    if GB != B:
        # (8,128) tiling rule: non-full blocks need sublane-aligned row counts.
        assert GB % 8 == 0 and (GB * N) % 8 == 0, \
            "tiled blocks must be sublane (8) aligned; use graphs_per_block=B otherwise"
    TM = GB * N
    grid = (B // GB,)

    # One-time parameter packing: a single wide dot computes both FiLM gates.
    W = jnp.concatenate([params["W_gama"], params["W_beta"]], axis=1)           # (C, 2C)
    U = jnp.concatenate([params["U_gama"], params["U_beta"]], axis=1)           # (C, 2C)
    bias = jnp.concatenate([params["bais_gama"], params["bais_beta"]], axis=1)  # (1, 2C)
    # Grid-invariant FiLM offset hoisted out of the kernel: (1, 2C).
    const = (pattern_embedding.astype(jnp.float32) @ U.astype(jnp.float32)
             + bias.astype(jnp.float32))

    x2d = edge_attr.reshape(B * N, C)   # flatten batch into the matmul M dim

    def const_spec(block_shape):
        return pl.BlockSpec(block_shape, lambda i: (0, 0))

    vmem_est = _block_vmem_bytes(TM, GB, C, Cout)
    vmem_limit = int(min(max(2 * vmem_est, 16 << 20), 60 << 20))

    call = pl.pallas_call(
        graph_readout_kernel,
        grid=grid,
        in_specs=[
            pl.BlockSpec((TM, C), lambda i: (i, 0)),      # edge rows (tiled)
            const_spec((1, 2 * C)),                       # pattern @ U + bias
            const_spec((C, 2 * C)),                       # [W_gama | W_beta]
            const_spec((C, Cout)),                        # W_readout_g
            const_spec((1, Cout)),                        # bais_readout_g
        ],
        out_specs=(
            pl.BlockSpec((GB, Cout), lambda i: (i, 0)),   # result (per-graph)
            pl.BlockSpec((TM, 2 * C), lambda i: (i, 0)),  # fused [gama | beta]
        ),
        out_shape=(
            jax.ShapeDtypeStruct((B, Cout), jnp.float32),
            jax.ShapeDtypeStruct((B * N, 2 * C), side_dtype),
        ),
        compiler_params=pltpu.CompilerParams(
            dimension_semantics=("parallel",),
            vmem_limit_bytes=vmem_limit),
    )
    result, gb = call(x2d, const, W, params["W_readout_g"],
                      params["bais_readout_g"])

    # Split the fused side output in the wrapper (plain XLA slices).
    gama = gb[:, :C].reshape(B, N, C)
    beta = gb[:, C:].reshape(B, N, C)
    # TODO(synk): if gama/beta are only needed for backward, stop materializing
    # them here and recompute in a custom-VJP backward kernel (~3x less HBM traffic).
    return result, gama, beta


def _xavier_uniform(key, shape):
    # torch.nn.init.xavier_uniform_ for a 2-D tensor: fan_out = shape[0], fan_in = shape[1]
    fan_out, fan_in = shape
    bound = math.sqrt(6.0 / (fan_in + fan_out))
    return jax.random.uniform(key, shape, jnp.float32, -bound, bound)


def make_params(key, input_c, output_c):
    keys = jax.random.split(key, 8)
    return {
        "W_gama": _xavier_uniform(keys[0], (input_c, input_c)),
        "U_gama": _xavier_uniform(keys[1], (input_c, input_c)),
        "bais_gama": _xavier_uniform(keys[2], (1, input_c)),
        "W_beta": _xavier_uniform(keys[3], (input_c, input_c)),
        "U_beta": _xavier_uniform(keys[4], (input_c, input_c)),
        "bais_beta": _xavier_uniform(keys[5], (1, input_c)),
        "W_readout_g": _xavier_uniform(keys[6], (input_c, output_c)),
        "bais_readout_g": _xavier_uniform(keys[7], (1, output_c)),
    }


def graph_readout_reference(edge_attr, pattern_embedding, params):
    # Pure-JAX reference mirroring the PyTorch forward (correctness check).
    one = jnp.ones_like(edge_attr)
    gama = _leaky_relu(edge_attr @ params["W_gama"]
                       + one * (pattern_embedding @ params["U_gama"])
                       + one * params["bais_gama"])
    beta = _leaky_relu(edge_attr @ params["W_beta"]
                       + one * (pattern_embedding @ params["U_beta"])
                       + one * params["bais_beta"])
    new_edge = (gama + one) * edge_attr + beta
    mean = new_edge.mean(axis=1)
    result = _leaky_relu(mean @ params["W_readout_g"] + params["bais_readout_g"])
    return result, gama, beta


if __name__ == "__main__":
    # batch (graphs), edges per graph, input_channels, output_channels
    B, N, C, COUT = 16, 8, 32, 16

    key = jax.random.PRNGKey(0)
    k_param, k_edge, k_pat = jax.random.split(key, 3)

    params = make_params(k_param, C, COUT)
    edge_attr = jax.random.normal(k_edge, (B, N, C), dtype=jnp.float32)
    pattern_embedding = jax.random.normal(k_pat, (1, C), dtype=jnp.float32)

    # Default heuristic picks GB=8 -> grid=(2,): exercises the tiled,
    # multi-step "parallel" grid path (usable by both v7x TensorCores).
    result, gama, beta = graph_readout(edge_attr, pattern_embedding, params)
    jax.block_until_ready((result, gama, beta))

    ref_result, ref_gama, ref_beta = graph_readout_reference(
        edge_attr, pattern_embedding, params)

    assert jnp.allclose(result, ref_result, atol=1e-5, rtol=1e-5)
    assert jnp.allclose(gama, ref_gama, atol=1e-5, rtol=1e-5)
    assert jnp.allclose(beta, ref_beta, atol=1e-5, rtol=1e-5)

    print("KERNEL_OK")
</pallas_src>

<mosaic_0001>
module attributes {stable_mosaic.version = 11 : i64} {
  func.func @graph_readout_kernel(%arg0: i32, %arg1: memref<64x32xf32, #tpu.memory_space<vmem>>, %arg2: memref<1x64xf32, #tpu.memory_space<vmem>>, %arg3: memref<32x64xf32, #tpu.memory_space<vmem>>, %arg4: memref<32x16xf32, #tpu.memory_space<vmem>>, %arg5: memref<1x16xf32, #tpu.memory_space<vmem>>, %arg6: memref<8x16xf32, #tpu.memory_space<vmem>>, %arg7: memref<64x64xf32, #tpu.memory_space<vmem>>) attributes {dimension_semantics = [#tpu.dimension_semantics<parallel>], iteration_bounds = array<i64: 2>, scalar_prefetch = 0 : i64, scratch_operands = 0 : i64, tpu.core_type = #tpu.core_type<tc>, window_params = [{transform_indices = @transform_0, window_bounds = array<i64: 64, 32>}, {pipeline_mode = #tpu.pipeline_mode<synchronous>, transform_indices = @transform_1, window_bounds = array<i64: 1, 64>}, {pipeline_mode = #tpu.pipeline_mode<synchronous>, transform_indices = @transform_2, window_bounds = array<i64: 32, 64>}, {pipeline_mode = #tpu.pipeline_mode<synchronous>, transform_indices = @transform_3, window_bounds = array<i64: 32, 16>}, {pipeline_mode = #tpu.pipeline_mode<synchronous>, transform_indices = @transform_4, window_bounds = array<i64: 1, 16>}, {transform_indices = @transform_5, window_bounds = array<i64: 8, 16>}, {transform_indices = @transform_6, window_bounds = array<i64: 64, 64>}]} {
    %c0 = arith.constant 0 : index
    %c0_0 = arith.constant 0 : index
    %0 = vector.load %arg1[%c0, %c0_0] : memref<64x32xf32, #tpu.memory_space<vmem>>, vector<64x32xf32>
    %c0_1 = arith.constant 0 : index
    %c0_2 = arith.constant 0 : index
    %1 = vector.load %arg3[%c0_1, %c0_2] : memref<32x64xf32, #tpu.memory_space<vmem>>, vector<32x64xf32>
    %cst = arith.constant dense<0.000000e+00> : vector<64x64xf32>
    %2 = tpu.matmul %0, %1, %cst {dimension_numbers = #tpu.dot_dimension_numbers<[1], [0], [0], [1], [0, 0, 1, 1], [], []>} : vector<64x32xf32>, vector<32x64xf32>, vector<64x64xf32> -> vector<64x64xf32>
    %c0_3 = arith.constant 0 : index
    %c0_4 = arith.constant 0 : index
    %3 = vector.load %arg2[%c0_3, %c0_4] : memref<1x64xf32, #tpu.memory_space<vmem>>, vector<1x64xf32>
    %4 = vector.broadcast %3 : vector<1x64xf32> to vector<64x64xf32>
    %5 = arith.addf %2, %4 : vector<64x64xf32>
    %cst_5 = arith.constant 0.000000e+00 : f32
    %6 = vector.broadcast %cst_5 : f32 to vector<64x64xf32>
    %7 = arith.cmpf oge, %5, %6 : vector<64x64xf32>
    %cst_6 = arith.constant 0.00999999977 : f32
    %8 = vector.broadcast %cst_6 : f32 to vector<64x64xf32>
    %9 = arith.mulf %8, %5 : vector<64x64xf32>
    %10 = arith.select %7, %5, %9 : vector<64x64xi1>, vector<64x64xf32>
    %c0_7 = arith.constant 0 : index
    %c0_8 = arith.constant 0 : index
    %11 = vector.load %arg7[%c0_7, %c0_8] : memref<64x64xf32, #tpu.memory_space<vmem>>, vector<64x64xf32>
    tpu.vector_store %arg7[%c0_7, %c0_8], %10 {strides = array<i32>} : memref<64x64xf32, #tpu.memory_space<vmem>>, vector<64x64xf32>,
    %12 = vector.extract_strided_slice %10 {offsets = [0, 0], sizes = [64, 32], strides = [1, 1]} : vector<64x64xf32> to vector<64x32xf32>
    %13 = vector.extract_strided_slice %10 {offsets = [0, 32], sizes = [64, 32], strides = [1, 1]} : vector<64x64xf32> to vector<64x32xf32>
    %cst_9 = arith.constant 1.000000e+00 : f32
    %14 = vector.broadcast %cst_9 : f32 to vector<64x32xf32>
    %15 = arith.addf %12, %14 : vector<64x32xf32>
    %16 = arith.mulf %15, %0 : vector<64x32xf32>
    %17 = arith.addf %16, %13 : vector<64x32xf32>
    %18 = vector.shape_cast %17 : vector<64x32xf32> to vector<8x8x32xf32>
    %cst_10 = arith.constant dense<0.000000e+00> : vector<8x32xf32>
    %19 = vector.multi_reduction <add>, %18, %cst_10 [1] : vector<8x8x32xf32> to vector<8x32xf32>
    %cst_11 = arith.constant 1.250000e-01 : f32
    %20 = vector.broadcast %cst_11 : f32 to vector<8x32xf32>
    %21 = arith.mulf %19, %20 : vector<8x32xf32>
    %c0_12 = arith.constant 0 : index
    %c0_13 = arith.constant 0 : index
    %22 = vector.load %arg4[%c0_12, %c0_13] : memref<32x16xf32, #tpu.memory_space<vmem>>, vector<32x16xf32>
    %cst_14 = arith.constant dense<0.000000e+00> : vector<8x16xf32>
    %23 = tpu.matmul %21, %22, %cst_14 {dimension_numbers = #tpu.dot_dimension_numbers<[1], [0], [0], [1], [0, 0, 1, 1], [], []>} : vector<8x32xf32>, vector<32x16xf32>, vector<8x16xf32> -> vector<8x16xf32>
    %c0_15 = arith.constant 0 : index
    %c0_16 = arith.constant 0 : index
    %24 = vector.load %arg5[%c0_15, %c0_16] : memref<1x16xf32, #tpu.memory_space<vmem>>, vector<1x16xf32>
    %25 = vector.broadcast %24 : vector<1x16xf32> to vector<8x16xf32>
    %26 = arith.addf %23, %25 : vector<8x16xf32>
    %cst_17 = arith.constant 0.000000e+00 : f32
    %27 = vector.broadcast %cst_17 : f32 to vector<8x16xf32>
    %28 = arith.cmpf oge, %26, %27 : vector<8x16xf32>
    %cst_18 = arith.constant 0.00999999977 : f32
    %29 = vector.broadcast %cst_18 : f32 to vector<8x16xf32>
    %30 = arith.mulf %29, %26 : vector<8x16xf32>
    %31 = arith.select %28, %26, %30 : vector<8x16xi1>, vector<8x16xf32>
    %c0_19 = arith.constant 0 : index
    %c0_20 = arith.constant 0 : index
    %32 = vector.load %arg6[%c0_19, %c0_20] : memref<8x16xf32, #tpu.memory_space<vmem>>, vector<8x16xf32>
    tpu.vector_store %arg6[%c0_19, %c0_20], %31 {strides = array<i32>} : memref<8x16xf32, #tpu.memory_space<vmem>>, vector<8x16xf32>,
    return
  }
  func.func @transform_0(%arg0: i32) -> (i32, i32) {
    %c0_i32 = arith.constant 0 : i32
    %c0_i32_0 = arith.constant 0 : i32
    return %arg0, %c0_i32 : i32, i32
  }
  func.func @transform_1(%arg0: i32) -> (i32, i32) {
    %c0_i32 = arith.constant 0 : i32
    %c0_i32_0 = arith.constant 0 : i32
    %c0_i32_1 = arith.constant 0 : i32
    return %c0_i32, %c0_i32_0 : i32, i32
  }
  func.func @transform_2(%arg0: i32) -> (i32, i32) {
    %c0_i32 = arith.constant 0 : i32
    %c0_i32_0 = arith.constant 0 : i32
    %c0_i32_1 = arith.constant 0 : i32
    return %c0_i32, %c0_i32_0 : i32, i32
  }
  func.func @transform_3(%arg0: i32) -> (i32, i32) {
    %c0_i32 = arith.constant 0 : i32
    %c0_i32_0 = arith.constant 0 : i32
    %c0_i32_1 = arith.constant 0 : i32
    return %c0_i32, %c0_i32_0 : i32, i32
  }
  func.func @transform_4(%arg0: i32) -> (i32, i32) {
    %c0_i32 = arith.constant 0 : i32
    %c0_i32_0 = arith.constant 0 : i32
    %c0_i32_1 = arith.constant 0 : i32
    return %c0_i32, %c0_i32_0 : i32, i32
  }
  func.func @transform_5(%arg0: i32) -> (i32, i32) {
    %c0_i32 = arith.constant 0 : i32
    %c0_i32_0 = arith.constant 0 : i32
    return %arg0, %c0_i32 : i32, i32
  }
  func.func @transform_6(%arg0: i32) -> (i32, i32) {
    %c0_i32 = arith.constant 0 : i32
    %c0_i32_0 = arith.constant 0 : i32
    return %arg0, %c0_i32 : i32, i32
  }
}

</mosaic_0001>

<llo_original>
// kernel: tpu_custom_call.1
$region0: #{tpu_custom_call.1}
  #allocation0 [shape = 'u32[]', space=smem, size = 0x4, offset = 0x4, fixed_abs, tag = 'smem constant byte address 0x4 - core index']
  #allocation1 [shape = 'u32[144,128]{1,0:T(1,128)}', space=vmem, size = 0x12000, scoped, tag = 'internal scratch']
  %s0 = inlined_call_operand.vmem [shape: f32[128,32], index: 0, kind: input, shape index: {}]
  %s1 = inlined_call_operand.vmem [shape: f32[1,64], index: 1, kind: input, shape index: {}]
  %s2 = inlined_call_operand.vmem [shape: f32[32,64], index: 2, kind: input, shape index: {}]
  %s3 = inlined_call_operand.vmem [shape: f32[32,16], index: 3, kind: input, shape index: {}]
  %s4 = inlined_call_operand.vmem [shape: f32[1,16], index: 4, kind: input, shape index: {}]
  %s5 = inlined_call_operand.hbm [shape: f32[16,16], index: 5, kind: output, shape index: {0}]
  %s6 = inlined_call_operand.vmem [shape: f32[128,64], index: 6, kind: output, shape index: {1}]
  %7 = xla_tuple %s5, %s6
  %s8 = sld [smem:[#allocation0]]
  $region61: #{tpu_custom_call.1} parent=0
    _
  %s10 = ssub.s32 1, %s8
  %s11 = scalar_select 0, %s10, %s8
  $region1: #{tpu_custom_call.1} parent=0
    #allocation2 [shape = 'u8[8192]{0}', space=vmem, size = 0x2000, scoped, tag = 'output window, operand 0']
    #allocation3 [shape = 's32[2]{0}', space=sflag, size = 0x8, scoped, tag = 'scoped memory for tpu_custom_call.1']
    %12 = vsyncpa [#allocation3], 0
    %s13 = scalar_lea.sflag [#allocation3], 1
    %14 = vsyncpa %s13, 0
    loop: start=0, step=1, limit=4
    $region2: #{tpu_custom_call.1} parent=1 // loop_pre_header
      _
    $region3: #{tpu_custom_call.1} parent=1 // loop_header
      %s16 = sphi 0, %s20
      %p17 = scmp.ge.s32.totalorder %s16, 4
      %s26 = sphi 0, %s28
      %s29 = sphi 0, %s26
      %s30 = sphi 0, %s29
      %s46 = sphi 0, %s30
      %s50 = sphi 0, %s50
      %s52 = sphi 0, %s50
      %s53 = sphi 0, %s52
      %s67 = sphi 0, %s53
      %s71 = sphi 0, %s71
      %s73 = sphi 0, %s71
      %s74 = sphi 0, %s73
      %s88 = sphi 0, %s74
      %s92 = sphi 0, %s92
      %s94 = sphi 0, %s92
      %s95 = sphi 0, %s94
      %s109 = sphi 0, %s95
      %s113 = sphi 0, %s113
      %s115 = sphi 0, %s113
      %s116 = sphi 0, %s115
      %s130 = sphi 0, %s116
      %s136 = sphi 0, %s138
      %s139 = sphi 0, %s136
      %s140 = sphi 0, %s139
      %s156 = sphi 0, %s140
      %s162 = sphi 0, %s164
      %s165 = sphi 0, %s162
      %s166 = sphi 0, %s165
      %s182 = sphi 0, %s166
    $region4: #{tpu_custom_call.1} parent=1 // loop_header_branch
      %19 = sbr.rel (%p17) target = $region8
    $region5: #{tpu_custom_call.1} parent=1 // loop_body
      %s21 = ssub.s32 %s16, 1
      %s22 = ssub.s32 %s16, 2
      %s23 = sadd.s32 %s16, 1
      %s24 = ssub.s32 %s16, %s23
      %p25 = scmp.eq.s32.totalorder %s24, 0
      %s27 = sadd.s32 %s26, 1
      %s28 = scalar_select %p25, %s26, %s27
      %p31 = pneg %p25
      %p32 = scmp.eq.s32.totalorder %s16, 1
      %p33 = por %p31, %p32
      %p34 = scmp.ne.s32.totalorder %s26, %s29
      %p35 = scmp.eq.s32.totalorder %s16, 0
      %p36 = por %p34, %p35
      %p37 = scmp.ne.s32.totalorder %s26, %s29
      %p38 = scmp.eq.s32.totalorder %s21, 1
      %p39 = por %p37, %p38
      %p40 = scmp.ne.s32.totalorder %s29, %s30
      %p41 = scmp.eq.s32.totalorder %s21, 0
      %p42 = por %p40, %p41
      %p43 = scmp.ne.s32.totalorder %s29, %s30
      %p44 = scmp.eq.s32.totalorder %s22, 1
      %p45 = por %p43, %p44
      %p47 = scmp.ne.s32.totalorder %s30, %s46
      %p48 = scmp.eq.s32.totalorder %s22, 0
      %p49 = por %p47, %p48
      %s51 = sadd.s32 %s50, 1
      %p54 = scmp.eq.s32.totalorder %s16, 1
      %p55 = scmp.ne.s32.totalorder %s50, %s52
      %p56 = scmp.eq.s32.totalorder %s16, 0
      %p57 = por %p55, %p56
      %p58 = scmp.ne.s32.totalorder %s50, %s52
      %p59 = scmp.eq.s32.totalorder %s21, 1
      %p60 = por %p58, %p59
      %p61 = scmp.ne.s32.totalorder %s52, %s53
      %p62 = scmp.eq.s32.totalorder %s21, 0
      %p63 = por %p61, %p62
      %p64 = scmp.ne.s32.totalorder %s52, %s53
      %p65 = scmp.eq.s32.totalorder %s22, 1
      %p66 = por %p64, %p65
      %p68 = scmp.ne.s32.totalorder %s53, %s67
      %p69 = scmp.eq.s32.totalorder %s22, 0
      %p70 = por %p68, %p69
      %s72 = sadd.s32 %s71, 1
      %p75 = scmp.eq.s32.totalorder %s16, 1
      %p76 = scmp.ne.s32.totalorder %s71, %s73
      %p77 = scmp.eq.s32.totalorder %s16, 0
      %p78 = por %p76, %p77
      %p79 = scmp.ne.s32.totalorder %s71, %s73
      %p80 = scmp.eq.s32.totalorder %s21, 1
      %p81 = por %p79, %p80
      %p82 = scmp.ne.s32.totalorder %s73, %s74
      %p83 = scmp.eq.s32.totalorder %s21, 0
      %p84 = por %p82, %p83
      %p85 = scmp.ne.s32.totalorder %s73, %s74
      %p86 = scmp.eq.s32.totalorder %s22, 1
      %p87 = por %p85, %p86
      %p89 = scmp.ne.s32.totalorder %s74, %s88
      %p90 = scmp.eq.s32.totalorder %s22, 0
      %p91 = por %p89, %p90
      %s93 = sadd.s32 %s92, 1
      %p96 = scmp.eq.s32.totalorder %s16, 1
      %p97 = scmp.ne.s32.totalorder %s92, %s94
      %p98 = scmp.eq.s32.totalorder %s16, 0
      %p99 = por %p97, %p98
      %p100 = scmp.ne.s32.totalorder %s92, %s94
      %p101 = scmp.eq.s32.totalorder %s21, 1
      %p102 = por %p100, %p101
      %p103 = scmp.ne.s32.totalorder %s94, %s95
      %p104 = scmp.eq.s32.totalorder %s21, 0
      %p105 = por %p103, %p104
      %p106 = scmp.ne.s32.totalorder %s94, %s95
      %p107 = scmp.eq.s32.totalorder %s22, 1
      %p108 = por %p106, %p107
      %p110 = scmp.ne.s32.totalorder %s95, %s109
      %p111 = scmp.eq.s32.totalorder %s22, 0
      %p112 = por %p110, %p111
      %s114 = sadd.s32 %s113, 1
      %p117 = scmp.eq.s32.totalorder %s16, 1
      %p118 = scmp.ne.s32.totalorder %s113, %s115
      %p119 = scmp.eq.s32.totalorder %s16, 0
      %p120 = por %p118, %p119
      %p121 = scmp.ne.s32.totalorder %s113, %s115
      %p122 = scmp.eq.s32.totalorder %s21, 1
      %p123 = por %p121, %p122
      %p124 = scmp.ne.s32.totalorder %s115, %s116
      %p125 = scmp.eq.s32.totalorder %s21, 0
      %p126 = por %p124, %p125
      %p127 = scmp.ne.s32.totalorder %s115, %s116
      %p128 = scmp.eq.s32.totalorder %s22, 1
      %p129 = por %p127, %p128
      %p131 = scmp.ne.s32.totalorder %s116, %s130
      %p132 = scmp.eq.s32.totalorder %s22, 0
      %p133 = por %p131, %p132
      %s134 = ssub.s32 %s16, %s23
      %p135 = scmp.eq.s32.totalorder %s134, 0
      %s137 = sadd.s32 %s136, 1
      %s138 = scalar_select %p135, %s136, %s137
      %p141 = pneg %p135
      %p142 = scmp.eq.s32.totalorder %s16, 1
      %p143 = por %p141, %p142
      %p144 = scmp.ne.s32.totalorder %s136, %s139
      %p145 = scmp.eq.s32.totalorder %s16, 0
      %p146 = por %p144, %p145
      %p147 = scmp.ne.s32.totalorder %s136, %s139
      %p148 = scmp.eq.s32.totalorder %s21, 1
      %p149 = por %p147, %p148
      %p150 = scmp.ne.s32.totalorder %s139, %s140
      %p151 = scmp.eq.s32.totalorder %s21, 0
      %p152 = por %p150, %p151
      %p153 = scmp.ne.s32.totalorder %s139, %s140
      %p154 = scmp.eq.s32.totalorder %s22, 1
      %p155 = por %p153, %p154
      %p157 = scmp.ne.s32.totalorder %s140, %s156
      %p158 = scmp.eq.s32.totalorder %s22, 0
      %p159 = por %p157, %p158
      %s160 = ssub.s32 %s16, %s23
      %p161 = scmp.eq.s32.totalorder %s160, 0
      %s163 = sadd.s32 %s162, 1
      %s164 = scalar_select %p161, %s162, %s163
      %p167 = pneg %p161
      %p168 = scmp.eq.s32.totalorder %s16, 1
      %p169 = por %p167, %p168
      %p170 = scmp.ne.s32.totalorder %s162, %s165
      %p171 = scmp.eq.s32.totalorder %s16, 0
      %p172 = por %p170, %p171
      %p173 = scmp.ne.s32.totalorder %s162, %s165
      %p174 = scmp.eq.s32.totalorder %s21, 1
      %p175 = por %p173, %p174
      %p176 = scmp.ne.s32.totalorder %s165, %s166
      %p177 = scmp.eq.s32.totalorder %s21, 0
      %p178 = por %p176, %p177
      %p179 = scmp.ne.s32.totalorder %s165, %s166
      %p180 = scmp.eq.s32.totalorder %s22, 1
      %p181 = por %p179, %p180
      %p183 = scmp.ne.s32.totalorder %s166, %s182
      %p184 = scmp.eq.s32.totalorder %s22, 0
      %p185 = por %p183, %p184
      %p186 = scmp.le.s32.totalorder 1, %s16
      %p187 = scmp.lt.s32.totalorder %s16, 3
      %p188 = pnand %p186, %p187
      %p189 = pneg %p188
      // Predicated region
      $region9: #{tpu_custom_call.1} parent=5 // pred_check
        _
      $region10: #{tpu_custom_call.1} parent=5 // pred_check_branch
        %191 = sbr.rel (%p188) target = $region12
      $region11: #{tpu_custom_call.1} parent=5 // pred_region
        %s192 = ssub.s32 %s16, 1
        // Predicated region
        $region13: #{tpu_custom_call.1} parent=11 // pred_check
          %p193 = pneg %p63
        $region14: #{tpu_custom_call.1} parent=11 // pred_check_branch
          %195 = sbr.rel (%p193) target = $region16
        $region15: #{tpu_custom_call.1} parent=11 // pred_region
          _
        $region16: #{tpu_custom_call.1} parent=11 // pred_fallthru
          _
        // Predicated region
        $region17: #{tpu_custom_call.1} parent=11 // pred_check
          %p196 = pneg %p84
        $region18: #{tpu_custom_call.1} parent=11 // pred_check_branch
          %198 = sbr.rel (%p196) target = $region20
        $region19: #{tpu_custom_call.1} parent=11 // pred_region
          _
        $region20: #{tpu_custom_call.1} parent=11 // pred_fallthru
          _
        // Predicated region
        $region21: #{tpu_custom_call.1} parent=11 // pred_check
          %p199 = pneg %p105
        $region22: #{tpu_custom_call.1} parent=11 // pred_check_branch
          %201 = sbr.rel (%p199) target = $region24
        $region23: #{tpu_custom_call.1} parent=11 // pred_region
          _
        $region24: #{tpu_custom_call.1} parent=11 // pred_fallthru
          _
        // Predicated region
        $region25: #{tpu_custom_call.1} parent=11 // pred_check
          %p202 = pneg %p126
        $region26: #{tpu_custom_call.1} parent=11 // pred_check_branch
          %204 = sbr.rel (%p202) target = $region28
        $region27: #{tpu_custom_call.1} parent=11 // pred_region
          _
        $region28: #{tpu_custom_call.1} parent=11 // pred_fallthru
          _
      $region12: #{tpu_custom_call.1} parent=5 // pred_fallthru
        _
      %p205 = scmp.lt.s32.totalorder %s16, 2
      // Predicated region
      $region29: #{tpu_custom_call.1} parent=5 // pred_check
        %p206 = pneg %p205
      $region30: #{tpu_custom_call.1} parent=5 // pred_check_branch
        %208 = sbr.rel (%p206) target = $region32
      $region31: #{tpu_custom_call.1} parent=5 // pred_region
        // Predicated region
        $region33: #{tpu_custom_call.1} parent=31 // pred_check
          %p209 = pneg %p36
        $region34: #{tpu_custom_call.1} parent=31 // pred_check_branch
          %211 = sbr.rel (%p209) target = $region36
        $region35: #{tpu_custom_call.1} parent=31 // pred_region
          %s212 = smul.u32 8, %s16
          %p213 = scmp.lt.s32.totalorder %s212, 15
          %s214 = scalar_select %p213, %s212, 15
          %s215 = smul.addr %s214, 8
          %s216 = scalar_lea.vmem %s0, %s215
          %s217 = smul.u32 8, %s16
        $region36: #{tpu_custom_call.1} parent=31 // pred_fallthru
          _
      $region32: #{tpu_custom_call.1} parent=5 // pred_fallthru
        _
      %p218 = scmp.le.s32.totalorder 1, %s16
      %p219 = scmp.lt.s32.totalorder %s16, 3
      %p220 = pnand %p218, %p219
      %p221 = pneg %p220
      // Predicated region
      $region37: #{tpu_custom_call.1} parent=5 // pred_check
        _
      $region38: #{tpu_custom_call.1} parent=5 // pred_check_branch
        %223 = sbr.rel (%p220) target = $region40
      $region39: #{tpu_custom_call.1} parent=5 // pred_region
        %s224 = ssub.s32 %s16, 1
        %s225 = smul.u32 8, %s21
        %p226 = scmp.lt.s32.totalorder %s225, 15
        %s227 = scalar_select %p226, %s225, 15
        %s228 = smul.addr %s227, 8
        %s229 = scalar_lea.vmem %s0, %s228
        %p230 = pneg %p42
        %p231 = pneg %p39
        %p232 = pneg %p63
        %p233 = pneg %p60
        %p234 = pneg %p84
        %p235 = pneg %p81
        %p236 = pneg %p105
        %p237 = pneg %p102
        %p238 = pneg %p126
        %p239 = pneg %p123
        %p240 = pneg %p152
        %p241 = pneg %p149
        %s242 = sand.u32 %s139, 1
        %s243 = scalar_lea.sflag [#allocation3], %s242
        %s244 = sand.u32 %s139, 1
        %s245 = smul.addr %s244, 8
        %s246 = scalar_lea.vmem [#allocation2], %s245
        %p247 = pneg %p178
        %p248 = pneg %p175
        %s249 = smul.u32 8, %s21
        %p250 = scmp.lt.s32.totalorder %s249, 15
        %s251 = scalar_select %p250, %s249, 15
        %s252 = smul.addr %s251, 8
        %s253 = scalar_lea.vmem %s6, %s252
        %s254 = smul.u32 8, %s21
        %p255 = scmp.lt.s32.totalorder %s254, 15
        %s256 = scalar_select %p255, %s254, 15
        %s257 = smul.addr %s256, 8
        %s258 = scalar_lea.vmem %s0, %s257
        %s259 = smul.u32 8, %s21
        %s260 = smul.u32 8, %s21
        %p261 = scmp.lt.s32.totalorder %s260, 15
        %s262 = scalar_select %p261, %s260, 15
        %s263 = smul.addr %s262, 8
        %s264 = scalar_lea.vmem %s6, %s263
        %s265 = smul.u32 8, %s21
        %v266 = vld [vmem:[%s258] sm:$0xff]
        %v267 = vld [vmem:[%s258 + $0x8] sm:$0xff]
        %v268 = vld [vmem:[%s258 + $0x10] sm:$0xff]
        %v269 = vld [vmem:[%s258 + $0x18] sm:$0xff]
        %v270 = vld [vmem:[%s258 + $0x20] sm:$0xff]
        %v271 = vld [vmem:[%s258 + $0x28] sm:$0xff]
        %v272 = vld [vmem:[%s258 + $0x30] sm:$0xff]
        %v273 = vld [vmem:[%s258 + $0x38] sm:$0xff]
        %v274 = vld [vmem:[%s2] sm:$0xff]
        %v275 = vld [vmem:[%s2 + $0x8] sm:$0xff]
        %v276 = vld [vmem:[%s2 + $0x10] sm:$0xff]
        %v277 = vld [vmem:[%s2 + $0x18] sm:$0xff]
        %v278 = vld [vmem:[%s1] sm:$0x1]
        %v280 = vlaneseq
        %v281 = vshrl.u32 %v280, 7
        %v282 = vsub.s32 0, %v281
        %v283 = vrot.slane %v278, %v282
        %vm285 = vcmask 261120
        %v287 = vsel %vm285, %v266, 0
        %v290 = vsel %vm285, %v267, 0
        %v293 = vsel %vm285, %v268, 0
        %v296 = vsel %vm285, %v269, 0
        %v299 = vsel %vm285, %v270, 0
        %v302 = vsel %vm285, %v271, 0
        %v305 = vsel %vm285, %v272, 0
        %v308 = vsel %vm285, %v273, 0
        %310 = vmatprep.subr.mxu0 0.0
        %311 = vmatpush1.msra.mxu0 %v274
        %312 = vmatprep.subr.mxu0 0.0
        %313 = vmatpush1.msra.mxu0 %v275
        %314 = vmatprep.subr.mxu0 0.0
        %315 = vmatpush1.msra.mxu0 %v276
        %316 = vmatprep.subr.mxu0 0.0
        %317 = vmatpush1.msra.mxu0 %v277
        %318 = vmatprep.subr.mxu0 0.0
        %319 = vmatpush1.msra.mxu0 0.0
        %320 = vmatprep.subr.mxu0 0.0
        %321 = vmatpush1.msra.mxu0 0.0
        %322 = vmatprep.subr.mxu0 0.0
        %323 = vmatpush1.msra.mxu0 0.0
        %324 = vmatprep.subr.mxu0 0.0
        %325 = vmatpush1.msra.mxu0 0.0
        %326 = vmatprep.subr.mxu0 0.0
        %327 = vmatpush1.msra.mxu0 0.0
        %328 = vmatprep.subr.mxu0 0.0
        %329 = vmatpush1.msra.mxu0 0.0
        %330 = vmatprep.subr.mxu0 0.0
        %331 = vmatpush1.msra.mxu0 0.0
        %332 = vmatprep.subr.mxu0 0.0
        %333 = vmatpush1.msra.mxu0 0.0
        %334 = vmatprep.subr.mxu0 0.0
        %335 = vmatpush1.msra.mxu0 0.0
        %336 = vmatprep.subr.mxu0 0.0
        %337 = vmatpush1.msra.mxu0 0.0
        %338 = vmatprep.subr.mxu0 0.0
        %339 = vmatpush1.msra.mxu0 0.0
        %340 = vmatprep.subr.mxu0 0.0
        %341 = vmatpush1.msra.mxu0 0.0
        %342 = vmatprep.subr.mxu0 0.0
        %343 = vmatpush1.msra.mxu0 0.0
        %344 = vmatprep.subr.mxu0 0.0
        %345 = vmatpush1.msra.mxu0 0.0
        %346 = vmatprep.subr.mxu0 0.0
        %347 = vmatpush1.msra.mxu0 0.0
        %348 = vmatprep.subr.mxu0 0.0
        %349 = vmatpush1.msra.mxu0 0.0
        %350 = vmatprep.subr.mxu0 0.0
        %351 = vmatpush1.msra.mxu0 0.0
        %352 = vmatprep.subr.mxu0 0.0
        %353 = vmatpush1.msra.mxu0 0.0
        %354 = vmatprep.subr.mxu0 0.0
        %355 = vmatpush1.msra.mxu0 0.0
        %356 = vmatprep.subr.mxu0 0.0
        %357 = vmatpush1.msra.mxu0 0.0
        %358 = vmatprep.subr.mxu0 0.0
        %359 = vmatpush1.msra.mxu0 0.0
        %360 = vmatprep.subr.mxu0 0.0
        %361 = vmatpush1.msra.mxu0 0.0
        %362 = vmatprep.subr.mxu0 0.0
        %363 = vmatpush1.msra.mxu0 0.0
        %364 = vmatprep.subr.mxu0 0.0
        %365 = vmatpush1.msra.mxu0 0.0
        %366 = vmatprep.subr.mxu0 0.0
        %367 = vmatpush1.msra.mxu0 0.0
        %368 = vmatprep.subr.mxu0 0.0
        %369 = vmatpush1.msra.mxu0 0.0
        %370 = vmatprep.subr.mxu0 0.0
        %371 = vmatpush1.msra.mxu0 0.0
        %372 = vmatprep.subr.mxu0 0.0
        %373 = vmatpush1.msra.mxu0 0.0
        %374 = vmatprep.mubr.f32.mxu0 0.0
        %375 = vmatmul.mubr.f32.gmra.mrb[0].mxu0 %v287
        %v376 = vpop.f32.mrb[0].mxu0
        %v377 = vadd.f32 %v283, %v376
        %v378 = vpop.f32.mrb[0].mxu0
        %379 = vmatprep.mubr.f32.mxu0 0.0
        %380 = vmatmul.mubr.f32.gmra.mrb[0].mxu0 %v290
        %v381 = vpop.f32.mrb[0].mxu0
        %v382 = vadd.f32 %v283, %v381
        %v383 = vpop.f32.mrb[0].mxu0
        %384 = vmatprep.mubr.f32.mxu0 0.0
        %385 = vmatmul.mubr.f32.gmra.mrb[0].mxu0 %v293
        %v386 = vpop.f32.mrb[0].mxu0
        %v387 = vadd.f32 %v283, %v386
        %v388 = vpop.f32.mrb[0].mxu0
        %389 = vmatprep.mubr.f32.mxu0 0.0
        %390 = vmatmul.mubr.f32.gmra.mrb[0].mxu0 %v296
        %v391 = vpop.f32.mrb[0].mxu0
        %v392 = vadd.f32 %v283, %v391
        %v393 = vpop.f32.mrb[0].mxu0
        %394 = vmatprep.mubr.f32.mxu0 0.0
        %395 = vmatmul.mubr.f32.gmra.mrb[0].mxu0 %v299
        %v396 = vpop.f32.mrb[0].mxu0
        %v397 = vadd.f32 %v283, %v396
        %v398 = vpop.f32.mrb[0].mxu0
        %399 = vmatprep.mubr.f32.mxu0 0.0
        %400 = vmatmul.mubr.f32.gmra.mrb[0].mxu0 %v302
        %v401 = vpop.f32.mrb[0].mxu0
        %v402 = vadd.f32 %v283, %v401
        %v403 = vpop.f32.mrb[0].mxu0
        %404 = vmatprep.mubr.f32.mxu0 0.0
        %405 = vmatmul.mubr.f32.gmra.mrb[0].mxu0 %v305
        %v406 = vpop.f32.mrb[0].mxu0
        %v407 = vadd.f32 %v283, %v406
        %v408 = vpop.f32.mrb[0].mxu0
        %409 = vmatprep.mubr.f32.mxu0 0.0
        %410 = vmatmul.mubr.f32.gmra.mrb[0].mxu0 %v308
        %v411 = vpop.f32.mrb[0].mxu0
        %v412 = vadd.f32 %v283, %v411
        %v413 = vpop.f32.mrb[0].mxu0
        %414 = vdwg.mxu0
        %vm415 = vcmp.ge.f32.partialorder %v377, 0.0
        %vm416 = vcmp.ge.f32.partialorder %v382, 0.0
        %vm417 = vcmp.ge.f32.partialorder %v387, 0.0
        %vm418 = vcmp.ge.f32.partialorder %v392, 0.0
        %vm419 = vcmp.ge.f32.partialorder %v397, 0.0
        %vm420 = vcmp.ge.f32.partialorder %v402, 0.0
        %vm421 = vcmp.ge.f32.partialorder %v407, 0.0
        %vm422 = vcmp.ge.f32.partialorder %v412, 0.0
        %v423 = vmul.f32 %v377, 0.01
        %v424 = vmul.f32 %v382, 0.01
        %v425 = vmul.f32 %v387, 0.01
        %v426 = vmul.f32 %v392, 0.01
        %v427 = vmul.f32 %v397, 0.01
        %v428 = vmul.f32 %v402, 0.01
        %v429 = vmul.f32 %v407, 0.01
        %v430 = vmul.f32 %v412, 0.01
        %v431 = vsel %vm415, %v377, %v423
        %v432 = vsel %vm416, %v382, %v424
        %v433 = vsel %vm417, %v387, %v425
        %v434 = vsel %vm418, %v392, %v426
        %v435 = vsel %vm419, %v397, %v427
        %v436 = vsel %vm420, %v402, %v428
        %v437 = vsel %vm421, %v407, %v429
        %v438 = vsel %vm422, %v412, %v430
        %vm439 = vcmask 523264
        %440 = vst.msk [vmem:[%s264] sm:$0xff] %vm439, %v431
        %441 = vst.msk [vmem:[%s264 + $0x8] sm:$0xff] %vm439, %v432
        %442 = vst.msk [vmem:[%s264 + $0x10] sm:$0xff] %vm439, %v433
        %443 = vst.msk [vmem:[%s264 + $0x18] sm:$0xff] %vm439, %v434
        %444 = vst.msk [vmem:[%s264 + $0x20] sm:$0xff] %vm439, %v435
        %445 = vst.msk [vmem:[%s264 + $0x28] sm:$0xff] %vm439, %v436
        %446 = vst.msk [vmem:[%s264 + $0x30] sm:$0xff] %vm439, %v437
        %447 = vst.msk [vmem:[%s264 + $0x38] sm:$0xff] %vm439, %v438
        %v448 = vadd.f32 %v431, 1.0
        %v449 = vadd.f32 %v432, 1.0
        %v450 = vadd.f32 %v433, 1.0
        %v451 = vadd.f32 %v434, 1.0
        %v452 = vadd.f32 %v435, 1.0
        %v453 = vadd.f32 %v436, 1.0
        %v454 = vadd.f32 %v437, 1.0
        %v455 = vadd.f32 %v438, 1.0
        %v456 = vmul.f32 %v448, %v266
        %v457 = vmul.f32 %v449, %v267
        %v458 = vmul.f32 %v450, %v268
        %v459 = vmul.f32 %v451, %v269
        %v460 = vmul.f32 %v452, %v270
        %v461 = vmul.f32 %v453, %v271
        %v462 = vmul.f32 %v454, %v272
        %v463 = vmul.f32 %v455, %v273
        %472 = vrot.lane.b32.xlu0 %v431, 96
        %v473 = vpop.permute.xlu0 %472
        %474 = vrot.lane.b32.xlu0 %v432, 96
        %v475 = vpop.permute.xlu0 %474
        %476 = vrot.lane.b32.xlu0 %v433, 96
        %v477 = vpop.permute.xlu0 %476
        %478 = vrot.lane.b32.xlu0 %v434, 96
        %v479 = vpop.permute.xlu0 %478
        %480 = vrot.lane.b32.xlu0 %v435, 96
        %v481 = vpop.permute.xlu0 %480
        %482 = vrot.lane.b32.xlu0 %v436, 96
        %v483 = vpop.permute.xlu0 %482
        %484 = vrot.lane.b32.xlu0 %v437, 96
        %v485 = vpop.permute.xlu0 %484
        %486 = vrot.lane.b32.xlu0 %v438, 96
        %v487 = vpop.permute.xlu0 %486
        %v496 = vadd.f32 %v456, %v473
        %v497 = vadd.f32 %v457, %v475
        %v498 = vadd.f32 %v458, %v477
        %v499 = vadd.f32 %v459, %v479
        %v500 = vadd.f32 %v460, %v481
        %v501 = vadd.f32 %v461, %v483
        %v502 = vadd.f32 %v462, %v485
        %v503 = vadd.f32 %v463, %v487
        %v504 = vsel %vm285, %v496, 0.0
        %v505 = vrot.slane %v504, 4
        %v506 = vadd.f32 %v504, %v505
        %v507 = vrot.slane %v506, 2
        %v508 = vadd.f32 %v506, %v507
        %v509 = vrot.slane %v508, 1
        %v510 = vadd.f32 %v508, %v509
        %v511 = vsel %vm285, %v497, 0.0
        %v512 = vrot.slane %v511, 4
        %v513 = vadd.f32 %v511, %v512
        %v514 = vrot.slane %v513, 2
        %v515 = vadd.f32 %v513, %v514
        %v516 = vrot.slane %v515, 1
        %v517 = vadd.f32 %v515, %v516
        %v518 = vsel %vm285, %v498, 0.0
        %v519 = vrot.slane %v518, 4
        %v520 = vadd.f32 %v518, %v519
        %v521 = vrot.slane %v520, 2
        %v522 = vadd.f32 %v520, %v521
        %v523 = vrot.slane %v522, 1
        %v524 = vadd.f32 %v522, %v523
        %v525 = vsel %vm285, %v499, 0.0
        %v526 = vrot.slane %v525, 4
        %v527 = vadd.f32 %v525, %v526
        %v528 = vrot.slane %v527, 2
        %v529 = vadd.f32 %v527, %v528
        %v530 = vrot.slane %v529, 1
        %v531 = vadd.f32 %v529, %v530
        %v532 = vsel %vm285, %v500, 0.0
        %v533 = vrot.slane %v532, 4
        %v534 = vadd.f32 %v532, %v533
        %v535 = vrot.slane %v534, 2
        %v536 = vadd.f32 %v534, %v535
        %v537 = vrot.slane %v536, 1
        %v538 = vadd.f32 %v536, %v537
        %v539 = vsel %vm285, %v501, 0.0
        %v540 = vrot.slane %v539, 4
        %v541 = vadd.f32 %v539, %v540
        %v542 = vrot.slane %v541, 2
        %v543 = vadd.f32 %v541, %v542
        %v544 = vrot.slane %v543, 1
        %v545 = vadd.f32 %v543, %v544
        %v546 = vsel %vm285, %v502, 0.0
        %v547 = vrot.slane %v546, 4
        %v548 = vadd.f32 %v546, %v547
        %v549 = vrot.slane %v548, 2
        %v550 = vadd.f32 %v548, %v549
        %v551 = vrot.slane %v550, 1
        %v552 = vadd.f32 %v550, %v551
        %v553 = vsel %vm285, %v503, 0.0
        %v554 = vrot.slane %v553, 4
        %v555 = vadd.f32 %v553, %v554
        %v556 = vrot.slane %v555, 2
        %v557 = vadd.f32 %v555, %v556
        %v558 = vrot.slane %v557, 1
        %v559 = vadd.f32 %v557, %v558
        %v560 = vmul.f32 %v510, 0.125
        %v561 = vmul.f32 %v517, 0.125
        %v562 = vmul.f32 %v524, 0.125
        %v563 = vmul.f32 %v531, 0.125
        %v564 = vmul.f32 %v538, 0.125
        %v565 = vmul.f32 %v545, 0.125
        %v566 = vmul.f32 %v552, 0.125
        %v567 = vmul.f32 %v559, 0.125
        %v568 = vld [vmem:[%s3] sm:$0xff]
        %v569 = vld [vmem:[%s3 + $0x8] sm:$0xff]
        %v570 = vld [vmem:[%s3 + $0x10] sm:$0xff]
        %v571 = vld [vmem:[%s3 + $0x18] sm:$0xff]
        %v572 = vld [vmem:[%s4] sm:$0x1]
        %v574 = vlaneseq
        %v575 = vshrl.u32 %v574, 7
        %v576 = vsub.s32 0, %v575
        %v577 = vrot.slane %v572, %v576
        %vm587 = vcmask 1041409
        %v588 = vsel %vm587, %v561, %v560
        %vm589 = vcmask 1042434
        %v590 = vsel %vm589, %v562, %v588
        %vm591 = vcmask 1043459
        %v592 = vsel %vm591, %v563, %v590
        %vm593 = vcmask 1044484
        %v594 = vsel %vm593, %v564, %v592
        %vm595 = vcmask 1045509
        %v596 = vsel %vm595, %v565, %v594
        %vm597 = vcmask 1046534
        %v598 = vsel %vm597, %v566, %v596
        %vm599 = vcmask 1047559
        %v600 = vsel %vm599, %v567, %v598
        %v601 = vsel %vm285, %v600, 0
        %603 = vmatprep.subr.mxu0 0.0
        %604 = vmatpush1.msra.mxu0 %v568
        %605 = vmatprep.subr.mxu0 0.0
        %606 = vmatpush1.msra.mxu0 %v569
        %607 = vmatprep.subr.mxu0 0.0
        %608 = vmatpush1.msra.mxu0 %v570
        %609 = vmatprep.subr.mxu0 0.0
        %610 = vmatpush1.msra.mxu0 %v571
        %611 = vmatprep.subr.mxu0 0.0
        %612 = vmatpush1.msra.mxu0 0.0
        %613 = vmatprep.subr.mxu0 0.0
        %614 = vmatpush1.msra.mxu0 0.0
        %615 = vmatprep.subr.mxu0 0.0
        %616 = vmatpush1.msra.mxu0 0.0
        %617 = vmatprep.subr.mxu0 0.0
        %618 = vmatpush1.msra.mxu0 0.0
        %619 = vmatprep.subr.mxu0 0.0
        %620 = vmatpush1.msra.mxu0 0.0
        %621 = vmatprep.subr.mxu0 0.0
        %622 = vmatpush1.msra.mxu0 0.0
        %623 = vmatprep.subr.mxu0 0.0
        %624 = vmatpush1.msra.mxu0 0.0
        %625 = vmatprep.subr.mxu0 0.0
        %626 = vmatpush1.msra.mxu0 0.0
        %627 = vmatprep.subr.mxu0 0.0
        %628 = vmatpush1.msra.mxu0 0.0
        %629 = vmatprep.subr.mxu0 0.0
        %630 = vmatpush1.msra.mxu0 0.0
        %631 = vmatprep.subr.mxu0 0.0
        %632 = vmatpush1.msra.mxu0 0.0
        %633 = vmatprep.subr.mxu0 0.0
        %634 = vmatpush1.msra.mxu0 0.0
        %635 = vmatprep.subr.mxu0 0.0
        %636 = vmatpush1.msra.mxu0 0.0
        %637 = vmatprep.subr.mxu0 0.0
        %638 = vmatpush1.msra.mxu0 0.0
        %639 = vmatprep.subr.mxu0 0.0
        %640 = vmatpush1.msra.mxu0 0.0
        %641 = vmatprep.subr.mxu0 0.0
        %642 = vmatpush1.msra.mxu0 0.0
        %643 = vmatprep.subr.mxu0 0.0
        %644 = vmatpush1.msra.mxu0 0.0
        %645 = vmatprep.subr.mxu0 0.0
        %646 = vmatpush1.msra.mxu0 0.0
        %647 = vmatprep.subr.mxu0 0.0
        %648 = vmatpush1.msra.mxu0 0.0
        %649 = vmatprep.subr.mxu0 0.0
        %650 = vmatpush1.msra.mxu0 0.0
        %651 = vmatprep.subr.mxu0 0.0
        %652 = vmatpush1.msra.mxu0 0.0
        %653 = vmatprep.subr.mxu0 0.0
        %654 = vmatpush1.msra.mxu0 0.0
        %655 = vmatprep.subr.mxu0 0.0
        %656 = vmatpush1.msra.mxu0 0.0
        %657 = vmatprep.subr.mxu0 0.0
        %658 = vmatpush1.msra.mxu0 0.0
        %659 = vmatprep.subr.mxu0 0.0
        %660 = vmatpush1.msra.mxu0 0.0
        %661 = vmatprep.subr.mxu0 0.0
        %662 = vmatpush1.msra.mxu0 0.0
        %663 = vmatprep.subr.mxu0 0.0
        %664 = vmatpush1.msra.mxu0 0.0
        %665 = vmatprep.subr.mxu0 0.0
        %666 = vmatpush1.msra.mxu0 0.0
        %667 = vmatprep.mubr.f32.mxu0 0.0
        %668 = vmatmul.mubr.f32.gmra.mrb[0].mxu0 %v601
        %v669 = vpop.f32.mrb[0].mxu0
        %v670 = vadd.f32 %v577, %v669
        %v671 = vpop.f32.mrb[0].mxu0
        %672 = vdwg.mxu0
        %vm673 = vcmp.ge.f32.partialorder %v670, 0.0
        %v674 = vmul.f32 %v670, 0.01
        %v675 = vsel %vm673, %v670, %v674
        %vm676 = vcmask 130048
        %677 = vst.msk [vmem:[%s246] sm:$0xff] %vm676, %v675
        %s678 = sand.u32 %s139, 1
        %s679 = scalar_lea.sflag [#allocation3], %s678
        %s680 = sand.u32 %s139, 1
        %s681 = smul.addr %s680, 8
        %s682 = scalar_lea.vmem [#allocation2], %s681
        %s683 = smul.u32 8, %s21
        %p684 = scmp.lt.s32.totalorder %s683, 15
        %s685 = scalar_select %p684, %s683, 15
        %s686 = smul.addr %s685, 8
        %s687 = scalar_lea.vmem %s6, %s686
        // Predicated region
        $region41: #{tpu_custom_call.1} parent=39 // pred_check
          %p688 = pneg %p149
        $region42: #{tpu_custom_call.1} parent=39 // pred_check_branch
          %690 = sbr.rel (%p688) target = $region44
        $region43: #{tpu_custom_call.1} parent=39 // pred_region
          %s692 = ssub.s32 128, 128
          %693 = vsyncadd %s679, %s692
          %s694 = smul.addr %s21, 128
          %s695 = scalar_lea.hbm %s5, %s694
          %s697 = sshll.u32 %s682, 4
          %s698 = int_to_ptr.vmem [resolvable:$true] %s697
          %700 = dma.vmem_to_hbm [thread:$0]  %s698, 128, %s695, %s679
        $region44: #{tpu_custom_call.1} parent=39 // pred_fallthru
          _
        // Predicated region
        $region45: #{tpu_custom_call.1} parent=39 // pred_check
          %p701 = pneg %p175
        $region46: #{tpu_custom_call.1} parent=39 // pred_check_branch
          %703 = sbr.rel (%p701) target = $region48
        $region47: #{tpu_custom_call.1} parent=39 // pred_region
          %s704 = smul.u32 8, %s21
        $region48: #{tpu_custom_call.1} parent=39 // pred_fallthru
          _
      $region40: #{tpu_custom_call.1} parent=5 // pred_fallthru
        _
      %p705 = scmp.le.s32.totalorder 2, %s16
      // Predicated region
      $region49: #{tpu_custom_call.1} parent=5 // pred_check
        %p706 = pneg %p705
      $region50: #{tpu_custom_call.1} parent=5 // pred_check_branch
        %708 = sbr.rel (%p706) target = $region52
      $region51: #{tpu_custom_call.1} parent=5 // pred_region
        %s709 = ssub.s32 %s16, 2
        // Predicated region
        $region53: #{tpu_custom_call.1} parent=51 // pred_check
          %p710 = pneg %p155
        $region54: #{tpu_custom_call.1} parent=51 // pred_check_branch
          %712 = sbr.rel (%p710) target = $region56
        $region55: #{tpu_custom_call.1} parent=51 // pred_region
          %s713 = sand.u32 %s140, 1
          %s714 = scalar_lea.sflag [#allocation3], %s713
          %s715 = sand.u32 %s140, 1
          %s716 = smul.addr %s715, 8
          %s717 = scalar_lea.vmem [#allocation2], %s716
          %718 = dma.done %s714, 128
        $region56: #{tpu_custom_call.1} parent=51 // pred_fallthru
          _
        // Predicated region
        $region57: #{tpu_custom_call.1} parent=51 // pred_check
          %p719 = pneg %p181
        $region58: #{tpu_custom_call.1} parent=51 // pred_check_branch
          %721 = sbr.rel (%p719) target = $region60
        $region59: #{tpu_custom_call.1} parent=51 // pred_region
          %s722 = smul.u32 8, %s22
          %p723 = scmp.lt.s32.totalorder %s722, 15
          %s724 = scalar_select %p723, %s722, 15
          %s725 = smul.addr %s724, 8
          %s726 = scalar_lea.vmem %s6, %s725
        $region60: #{tpu_custom_call.1} parent=51 // pred_fallthru
          _
      $region52: #{tpu_custom_call.1} parent=5 // pred_fallthru
        _
    $region6: #{tpu_custom_call.1} parent=1 // loop_footer
      %s20 = sadd.s32 1, %s16
    $region7: #{tpu_custom_call.1} parent=1 // loop_footer_branch
      %15 = sbr.rel target = $region3
    $region8: #{tpu_custom_call.1} parent=1 // loop_exit
      _
    %727 = vsyncpa [#allocation3], 1
    %s728 = scalar_lea.sflag [#allocation3], 1
    %729 = vsyncpa %s728, 1

</llo_original>
